<compile_context>
chip_gen: v5e
topology: v5e:2x2
jax: 0.10.0
libtpu: 0.0.40
codegen_flags: <defaults>
</compile_context>

<pallas_src>
import jax
import jax.numpy as jnp
from jax.experimental import pallas as pl
from jax.experimental.pallas import tpu as pltpu


def hnn_kernel(x_ref, w1t_ref, b1_ref, w2t_ref, w2o_ref, b2_ref, w3_ref, w1s_ref,
               out_ref):
    """One batch tile of the HNN forward + analytic symplectic gradient.

    x_ref   : (TB, D)   input tile (original dtype, cast in-kernel)
    w1t_ref : (D, Hp)   lin_1 weight, pre-transposed to (in, out), compute dtype
    b1_ref  : (1, Hp)   lin_1 bias (f32, zero-padded)
    w2t_ref : (Hp, Hp)  lin_2 weight, pre-transposed (in, out), compute dtype
    w2o_ref : (Hp, Hp)  lin_2 weight, original (out, in) layout, compute dtype
    b2_ref  : (1, Hp)   lin_2 bias (f32, zero-padded)
    w3_ref  : (1, Hp)   lin_3 weight row (f32, zero-padded)
    w1s_ref : (Hp, D)   symplectic-folded W1 = concat([W1[:, d:], -W1[:, :d]], 1), f32
    out_ref : (TB, D)   output tile = [dHdp, -dHdq]
    """
    cdt = w1t_ref.dtype                          # MXU operand dtype (bf16 fast path)
    x = x_ref[...].astype(cdt)                   # in-kernel cast: rides free VPU slots

    # ---- MLP forward (activations reused by the analytic backward) ----
    z1 = jnp.dot(x, w1t_ref[...], preferred_element_type=jnp.float32) + b1_ref[...]
    h1 = jnp.tanh(z1)                                                   # (TB, Hp) f32
    z2 = jnp.dot(h1.astype(cdt), w2t_ref[...],
                 preferred_element_type=jnp.float32) + b2_ref[...]
    a2 = jnp.tanh(z2)                                                   # (TB, Hp) f32

    # ---- analytic dH/dx for H = (h1 + tanh(h1 @ W2^T + b2)) @ w3^T + b3 ----
    w3 = w3_ref[...]                                                    # (1, Hp)
    g_z2 = w3 * (1.0 - a2 * a2)                                         # (TB, Hp)
    # dH/dh1 = w3 + g_z2 @ W2; W2 kept in its original (out,in) layout so this
    # is a canonical (M,K)x(K,N) matmul (no per-step relayout / transpose).
    g_h1 = w3 + jnp.dot(g_z2.astype(cdt), w2o_ref[...],
                        preferred_element_type=jnp.float32)             # (TB, Hp)
    g_pre = g_h1 * (1.0 - h1 * h1)                                      # (TB, Hp)

    # Symplectic permutation + negation already folded into w1s; final dot kept
    # in f32 for accuracy (N = D is tiny, cost negligible).
    out_ref[...] = jnp.dot(g_pre, w1s_ref[...],
                           preferred_element_type=jnp.float32).astype(out_ref.dtype)


def _round_up(n, m):
    return ((n + m - 1) // m) * m


def hnn_forward(x, w1, b1, w2, b2, w3, *,
                compute_dtype=jnp.bfloat16,
                out_dtype=jnp.float32,
                hidden_pad_multiple=128,      # use 256 on v6e/v7x to fill the 256^2 MXU
                block_b=None,                 # None -> auto-size TB against the VMEM budget
                max_block_b=2048,
                vmem_budget_bytes=40 * (1 << 20)):
    """HNN forward via Pallas. Weights follow nn.Linear convention (out, in).

    Note: weight prep (padding / transposes / casts) runs in the wrapper; if this
    is called inside a scan with traced weights, hoist the prep out of the loop.
    """
    B, D = x.shape
    H = w1.shape[0]
    assert D % 2 == 0, "input_dim must be even for the q/p split"
    d = D // 2

    f32 = jnp.float32
    # --- zero-pad the hidden dim (mathematically inert: tanh(0)=0, zero w3/w1s rows)
    Hp = max(_round_up(H, hidden_pad_multiple), hidden_pad_multiple)
    w1p = jnp.zeros((Hp, D), f32).at[:H].set(w1.astype(f32))
    b1p = jnp.zeros((Hp,), f32).at[:H].set(b1.astype(f32))
    w2p = jnp.zeros((Hp, Hp), f32).at[:H, :H].set(w2.astype(f32))
    b2p = jnp.zeros((Hp,), f32).at[:H].set(b2.astype(f32))
    w3p = jnp.zeros((Hp,), f32).at[:H].set(w3.reshape(-1).astype(f32))

    # --- host-side weight prep (paid once, not per grid step)
    w1t = w1p.T.astype(compute_dtype)                                  # (D, Hp)
    w2t = w2p.T.astype(compute_dtype)                                  # (Hp, Hp) forward
    w2o = w2p.astype(compute_dtype)                                    # (Hp, Hp) backward
    w1s = jnp.concatenate([w1p[:, d:], -w1p[:, :d]], axis=1)           # (Hp, D) f32
    b1r = b1p.reshape(1, Hp)
    b2r = b2p.reshape(1, Hp)
    w3r = w3p.reshape(1, Hp)

    # --- batch-tile sizing against the VMEM budget (v7x has only 64 MiB physical)
    c_bytes = jnp.dtype(compute_dtype).itemsize
    o_bytes = jnp.dtype(out_dtype).itemsize
    x_bytes = jnp.dtype(x.dtype).itemsize
    # Resident weights (conservatively assume the pipeline double-buffers them;
    # pipeline_mode=pl.Buffered(1) would reclaim ~half, left default for portability).
    weight_bytes = 2 * (D * Hp * c_bytes          # w1t
                        + 2 * Hp * Hp * c_bytes   # w2t + w2o
                        + Hp * D * 4              # w1s (f32)
                        + 3 * 8 * Hp * 4)         # b1, b2, w3 (sublane-padded)
    act_bytes_per_row = 6 * Hp * 4                # z1,h1,z2,a2,g_h1,g_pre live in f32
    io_bytes_per_row = 2 * D * (x_bytes + o_bytes)  # double-buffered x / out tiles
    per_row = act_bytes_per_row + io_bytes_per_row
    tb_max = max((vmem_budget_bytes - weight_bytes) // per_row, 8)

    cap = block_b if block_b is not None else max_block_b
    tb = int(min(B, tb_max, cap))
    if tb < B:  # non-full first dim must be a multiple of 8 (prefer 128 for MXU rows)
        tb = (tb // 128) * 128 if tb >= 128 else max((tb // 8) * 8, 8)

    # --- pad batch to a whole number of tiles (no partial-block tail)
    Bp = _round_up(B, tb)
    xp = x if Bp == B else jnp.zeros((Bp, D), x.dtype).at[:B].set(x)
    grid = (Bp // tb,)

    vmem_needed = weight_bytes + tb * per_row
    vmem_limit = int(min(max(vmem_needed * 5 // 4 + (4 << 20), 32 << 20), 56 << 20))

    cost = pl.CostEstimate(
        flops=int(2 * B * (D * Hp + 2 * Hp * Hp + Hp * D)),
        transcendentals=int(2 * B * Hp),
        bytes_accessed=int(B * D * (x_bytes + o_bytes)
                           + 2 * Hp * Hp * c_bytes
                           + D * Hp * (c_bytes + 4)
                           + 3 * Hp * 4),
    )

    def resident(shape):
        # Full-array block, constant index_map -> stays resident in VMEM across
        # all grid steps (DMA'd once).
        return pl.BlockSpec(shape, lambda i: (0, 0))

    out = pl.pallas_call(
        hnn_kernel,
        out_shape=jax.ShapeDtypeStruct((Bp, D), out_dtype),
        grid=grid,
        in_specs=[
            pl.BlockSpec((tb, D), lambda i: (i, 0)),   # x: batch-tiled, pipelined
            resident((D, Hp)),                         # w1t
            resident((1, Hp)),                         # b1
            resident((Hp, Hp)),                        # w2t (forward)
            resident((Hp, Hp)),                        # w2o (backward, original layout)
            resident((1, Hp)),                         # b2
            resident((1, Hp)),                         # w3
            resident((Hp, D)),                         # w1_sym (f32)
        ],
        out_specs=pl.BlockSpec((tb, D), lambda i: (i, 0)),
        compiler_params=pltpu.CompilerParams(
            dimension_semantics=("parallel",),         # shard batch over 2 TCs on v7x
            vmem_limit_bytes=vmem_limit,
        ),
        cost_estimate=cost,
    )(xp, w1t, b1r, w2t, w2o, b2r, w3r, w1s)

    return out[:B] if Bp != B else out


def hnn_reference(x, w1, b1, w2, b2, w3, b3):
    """Pure-JAX reference using autodiff, mirroring the PyTorch semantics."""
    def H_fn(xx):
        h1 = jnp.tanh(xx @ w1.T + b1)
        h = h1 + jnp.tanh(h1 @ w2.T + b2)
        y = h @ w3.reshape(-1) + b3
        return jnp.sum(y)

    g = jax.grad(H_fn)(x)
    d = x.shape[-1] // 2
    dHdq, dHdp = g[:, :d], g[:, d:]
    return jnp.concatenate([dHdp, -dHdq], axis=-1)


if __name__ == "__main__":
    B, D, HID = 8, 4, 32   # input_dim=4 (even, for q/p split), hidden_dim=32

    key = jax.random.PRNGKey(0)
    k = jax.random.split(key, 8)
    x = jax.random.normal(k[0], (B, D), dtype=jnp.float32)
    # Deterministic synthetic parameters (nn.Linear shapes: W=(out,in), b=(out,))
    w1 = jax.random.normal(k[1], (HID, D), dtype=jnp.float32) * 0.3
    b1 = jax.random.normal(k[2], (HID,), dtype=jnp.float32) * 0.1
    w2 = jax.random.normal(k[3], (HID, HID), dtype=jnp.float32) * 0.1
    b2 = jax.random.normal(k[4], (HID,), dtype=jnp.float32) * 0.1
    w3 = jax.random.normal(k[5], (1, HID), dtype=jnp.float32) * 0.3
    b3 = jax.random.normal(k[6], (1,), dtype=jnp.float32) * 0.1

    ref = hnn_reference(x, w1, b1, w2, b2, w3, b3[0])

    # f32-operand path (sanity of the generic wrapper + padding).
    out_f32 = jax.block_until_ready(
        hnn_forward(x, w1, b1, w2, b2, w3, compute_dtype=jnp.float32))
    assert out_f32.shape == (B, D), out_f32.shape
    assert jnp.allclose(out_f32, ref, atol=5e-2, rtol=5e-2), (out_f32, ref)

    # bf16 MXU operands / f32 accumulate (recommended perf path on v6e/v7x).
    out_bf16 = jax.block_until_ready(
        hnn_forward(x, w1, b1, w2, b2, w3, compute_dtype=jnp.bfloat16))
    assert out_bf16.shape == (B, D), out_bf16.shape
    assert jnp.allclose(out_bf16, ref, atol=5e-2, rtol=5e-2), (out_bf16, ref)

    # Multi-tile path: B not a multiple of the batch tile (exercises grid loop
    # and batch padding / tail slicing).
    B2 = 40
    x2 = jax.random.normal(k[7], (B2, D), dtype=jnp.float32)
    ref2 = hnn_reference(x2, w1, b1, w2, b2, w3, b3[0])
    out2 = jax.block_until_ready(
        hnn_forward(x2, w1, b1, w2, b2, w3, compute_dtype=jnp.bfloat16, block_b=16))
    assert out2.shape == (B2, D), out2.shape
    assert jnp.allclose(out2, ref2, atol=5e-2, rtol=5e-2), (out2, ref2)

    print("KERNEL_OK")
</pallas_src>

<mosaic_0001>
module attributes {stable_mosaic.version = 11 : i64} {
  func.func @hnn_kernel(%arg0: i32, %arg1: memref<8x4xf32, #tpu.memory_space<vmem>>, %arg2: memref<4x128xf32, #tpu.memory_space<vmem>>, %arg3: memref<1x128xf32, #tpu.memory_space<vmem>>, %arg4: memref<128x128xf32, #tpu.memory_space<vmem>>, %arg5: memref<128x128xf32, #tpu.memory_space<vmem>>, %arg6: memref<1x128xf32, #tpu.memory_space<vmem>>, %arg7: memref<1x128xf32, #tpu.memory_space<vmem>>, %arg8: memref<128x4xf32, #tpu.memory_space<vmem>>, %arg9: memref<8x4xf32, #tpu.memory_space<vmem>>) attributes {dimension_semantics = [#tpu.dimension_semantics<parallel>], iteration_bounds = array<i64: 1>, scalar_prefetch = 0 : i64, scratch_operands = 0 : i64, tpu.core_type = #tpu.core_type<tc>, window_params = [{transform_indices = @transform_0, window_bounds = array<i64: 8, 4>}, {pipeline_mode = #tpu.pipeline_mode<synchronous>, transform_indices = @transform_1, window_bounds = array<i64: 4, 128>}, {pipeline_mode = #tpu.pipeline_mode<synchronous>, transform_indices = @transform_2, window_bounds = array<i64: 1, 128>}, {pipeline_mode = #tpu.pipeline_mode<synchronous>, transform_indices = @transform_3, window_bounds = array<i64: 128, 128>}, {pipeline_mode = #tpu.pipeline_mode<synchronous>, transform_indices = @transform_4, window_bounds = array<i64: 128, 128>}, {pipeline_mode = #tpu.pipeline_mode<synchronous>, transform_indices = @transform_5, window_bounds = array<i64: 1, 128>}, {pipeline_mode = #tpu.pipeline_mode<synchronous>, transform_indices = @transform_6, window_bounds = array<i64: 1, 128>}, {pipeline_mode = #tpu.pipeline_mode<synchronous>, transform_indices = @transform_7, window_bounds = array<i64: 128, 4>}, {transform_indices = @transform_8, window_bounds = array<i64: 8, 4>}]} {
    %c0 = arith.constant 0 : index
    %c0_0 = arith.constant 0 : index
    %0 = vector.load %arg1[%c0, %c0_0] : memref<8x4xf32, #tpu.memory_space<vmem>>, vector<8x4xf32>
    %c0_1 = arith.constant 0 : index
    %c0_2 = arith.constant 0 : index
    %1 = vector.load %arg2[%c0_1, %c0_2] : memref<4x128xf32, #tpu.memory_space<vmem>>, vector<4x128xf32>
    %cst = arith.constant dense<0.000000e+00> : vector<8x128xf32>
    %2 = tpu.matmul %0, %1, %cst {dimension_numbers = #tpu.dot_dimension_numbers<[1], [0], [0], [1], [0, 0, 1, 1], [], []>} : vector<8x4xf32>, vector<4x128xf32>, vector<8x128xf32> -> vector<8x128xf32>
    %c0_3 = arith.constant 0 : index
    %c0_4 = arith.constant 0 : index
    %3 = vector.load %arg3[%c0_3, %c0_4] : memref<1x128xf32, #tpu.memory_space<vmem>>, vector<1x128xf32>
    %4 = vector.broadcast %3 : vector<1x128xf32> to vector<8x128xf32>
    %5 = arith.addf %2, %4 : vector<8x128xf32>
    %6 = math.tanh %5 : vector<8x128xf32>
    %c0_5 = arith.constant 0 : index
    %c0_6 = arith.constant 0 : index
    %7 = vector.load %arg4[%c0_5, %c0_6] : memref<128x128xf32, #tpu.memory_space<vmem>>, vector<128x128xf32>
    %cst_7 = arith.constant dense<0.000000e+00> : vector<8x128xf32>
    %8 = tpu.matmul %6, %7, %cst_7 {dimension_numbers = #tpu.dot_dimension_numbers<[1], [0], [0], [1], [0, 0, 1, 1], [], []>} : vector<8x128xf32>, vector<128x128xf32>, vector<8x128xf32> -> vector<8x128xf32>
    %c0_8 = arith.constant 0 : index
    %c0_9 = arith.constant 0 : index
    %9 = vector.load %arg6[%c0_8, %c0_9] : memref<1x128xf32, #tpu.memory_space<vmem>>, vector<1x128xf32>
    %10 = vector.broadcast %9 : vector<1x128xf32> to vector<8x128xf32>
    %11 = arith.addf %8, %10 : vector<8x128xf32>
    %12 = math.tanh %11 : vector<8x128xf32>
    %c0_10 = arith.constant 0 : index
    %c0_11 = arith.constant 0 : index
    %13 = vector.load %arg7[%c0_10, %c0_11] : memref<1x128xf32, #tpu.memory_space<vmem>>, vector<1x128xf32>
    %14 = arith.mulf %12, %12 : vector<8x128xf32>
    %cst_12 = arith.constant 1.000000e+00 : f32
    %15 = vector.broadcast %cst_12 : f32 to vector<8x128xf32>
    %16 = arith.subf %15, %14 : vector<8x128xf32>
    %17 = vector.broadcast %13 : vector<1x128xf32> to vector<8x128xf32>
    %18 = arith.mulf %17, %16 : vector<8x128xf32>
    %c0_13 = arith.constant 0 : index
    %c0_14 = arith.constant 0 : index
    %19 = vector.load %arg5[%c0_13, %c0_14] : memref<128x128xf32, #tpu.memory_space<vmem>>, vector<128x128xf32>
    %cst_15 = arith.constant dense<0.000000e+00> : vector<8x128xf32>
    %20 = tpu.matmul %18, %19, %cst_15 {dimension_numbers = #tpu.dot_dimension_numbers<[1], [0], [0], [1], [0, 0, 1, 1], [], []>} : vector<8x128xf32>, vector<128x128xf32>, vector<8x128xf32> -> vector<8x128xf32>
    %21 = vector.broadcast %13 : vector<1x128xf32> to vector<8x128xf32>
    %22 = arith.addf %21, %20 : vector<8x128xf32>
    %23 = arith.mulf %6, %6 : vector<8x128xf32>
    %cst_16 = arith.constant 1.000000e+00 : f32
    %24 = vector.broadcast %cst_16 : f32 to vector<8x128xf32>
    %25 = arith.subf %24, %23 : vector<8x128xf32>
    %26 = arith.mulf %22, %25 : vector<8x128xf32>
    %c0_17 = arith.constant 0 : index
    %c0_18 = arith.constant 0 : index
    %27 = vector.load %arg8[%c0_17, %c0_18] : memref<128x4xf32, #tpu.memory_space<vmem>>, vector<128x4xf32>
    %cst_19 = arith.constant dense<0.000000e+00> : vector<8x4xf32>
    %28 = tpu.matmul %26, %27, %cst_19 {dimension_numbers = #tpu.dot_dimension_numbers<[1], [0], [0], [1], [0, 0, 1, 1], [], []>} : vector<8x128xf32>, vector<128x4xf32>, vector<8x4xf32> -> vector<8x4xf32>
    %c0_20 = arith.constant 0 : index
    %c0_21 = arith.constant 0 : index
    %29 = vector.load %arg9[%c0_20, %c0_21] : memref<8x4xf32, #tpu.memory_space<vmem>>, vector<8x4xf32>
    tpu.vector_store %arg9[%c0_20, %c0_21], %28 {strides = array<i32>} : memref<8x4xf32, #tpu.memory_space<vmem>>, vector<8x4xf32>,
    return
  }
  func.func @transform_0(%arg0: i32) -> (i32, i32) {
    %c0_i32 = arith.constant 0 : i32
    %c0_i32_0 = arith.constant 0 : i32
    return %arg0, %c0_i32 : i32, i32
  }
  func.func @transform_1(%arg0: i32) -> (i32, i32) {
    %c0_i32 = arith.constant 0 : i32
    %c0_i32_0 = arith.constant 0 : i32
    %c0_i32_1 = arith.constant 0 : i32
    return %c0_i32, %c0_i32_0 : i32, i32
  }
  func.func @transform_2(%arg0: i32) -> (i32, i32) {
    %c0_i32 = arith.constant 0 : i32
    %c0_i32_0 = arith.constant 0 : i32
    %c0_i32_1 = arith.constant 0 : i32
    return %c0_i32, %c0_i32_0 : i32, i32
  }
  func.func @transform_3(%arg0: i32) -> (i32, i32) {
    %c0_i32 = arith.constant 0 : i32
    %c0_i32_0 = arith.constant 0 : i32
    %c0_i32_1 = arith.constant 0 : i32
    return %c0_i32, %c0_i32_0 : i32, i32
  }
  func.func @transform_4(%arg0: i32) -> (i32, i32) {
    %c0_i32 = arith.constant 0 : i32
    %c0_i32_0 = arith.constant 0 : i32
    %c0_i32_1 = arith.constant 0 : i32
    return %c0_i32, %c0_i32_0 : i32, i32
  }
  func.func @transform_5(%arg0: i32) -> (i32, i32) {
    %c0_i32 = arith.constant 0 : i32
    %c0_i32_0 = arith.constant 0 : i32
    %c0_i32_1 = arith.constant 0 : i32
    return %c0_i32, %c0_i32_0 : i32, i32
  }
  func.func @transform_6(%arg0: i32) -> (i32, i32) {
    %c0_i32 = arith.constant 0 : i32
    %c0_i32_0 = arith.constant 0 : i32
    %c0_i32_1 = arith.constant 0 : i32
    return %c0_i32, %c0_i32_0 : i32, i32
  }
  func.func @transform_7(%arg0: i32) -> (i32, i32) {
    %c0_i32 = arith.constant 0 : i32
    %c0_i32_0 = arith.constant 0 : i32
    %c0_i32_1 = arith.constant 0 : i32
    return %c0_i32, %c0_i32_0 : i32, i32
  }
  func.func @transform_8(%arg0: i32) -> (i32, i32) {
    %c0_i32 = arith.constant 0 : i32
    %c0_i32_0 = arith.constant 0 : i32
    return %arg0, %c0_i32 : i32, i32
  }
}

</mosaic_0001>

<llo_original>
// kernel: tpu_custom_call.1
$region0: #{tpu_custom_call.1}
  #allocation0 [shape = 'u32[]', space=smem, size = 0x4, offset = 0x4, fixed_abs, tag = 'smem constant byte address 0x4 - core index']
  #allocation1 [shape = 'u32[72,128]{1,0:T(1,128)}', space=vmem, size = 0x9000, scoped, tag = 'internal scratch']
  %s0 = inlined_call_operand.vmem [shape: f32[8,4], index: 0, kind: input, shape index: {}]
  %s1 = inlined_call_operand.vmem [shape: f32[4,128], index: 1, kind: input, shape index: {}]
  %s2 = inlined_call_operand.vmem [shape: f32[1,128], index: 2, kind: input, shape index: {}]
  %s3 = inlined_call_operand.vmem [shape: f32[128,128], index: 3, kind: input, shape index: {}]
  %s4 = inlined_call_operand.hbm [shape: f32[128,128], index: 4, kind: input, shape index: {}]
  %s5 = inlined_call_operand.vmem [shape: f32[1,128], index: 5, kind: input, shape index: {}]
  %s6 = inlined_call_operand.vmem [shape: f32[1,128], index: 6, kind: input, shape index: {}]
  %s7 = inlined_call_operand.vmem [shape: f32[128,4], index: 7, kind: input, shape index: {}]
  %s8 = inlined_call_operand.vmem [shape: f32[8,4], index: 8, kind: output, shape index: {}]
  %s9 = sld [smem:[#allocation0]]
  $region46: #{tpu_custom_call.1} parent=0
    _
  %s11 = ssub.s32 1, %s9
  %s12 = scalar_select 0, %s11, %s9
  $region1: #{tpu_custom_call.1} parent=0
    #allocation2 [shape = 'u8[65536]{0}', space=vmem, size = 0x10000, scoped, tag = 'input window, operand 4, single buffered']
    #allocation3 [shape = 's32[1]{0}', space=sflag, size = 0x4, scoped, tag = 'scoped memory for tpu_custom_call.1']
    %13 = vsyncpa [#allocation3], 0
    // Predicated region
    $region2: #{tpu_custom_call.1} parent=1 // pred_check
      _
    $region3: #{tpu_custom_call.1} parent=1 // pred_check_branch
      %15 = sbr.rel (0) target = $region5
    $region4: #{tpu_custom_call.1} parent=1 // pred_region
      _
    $region5: #{tpu_custom_call.1} parent=1 // pred_fallthru
      _
    // Predicated region
    $region6: #{tpu_custom_call.1} parent=1 // pred_check
      _
    $region7: #{tpu_custom_call.1} parent=1 // pred_check_branch
      %17 = sbr.rel (0) target = $region9
    $region8: #{tpu_custom_call.1} parent=1 // pred_region
      _
    $region9: #{tpu_custom_call.1} parent=1 // pred_fallthru
      _
    // Predicated region
    $region10: #{tpu_custom_call.1} parent=1 // pred_check
      _
    $region11: #{tpu_custom_call.1} parent=1 // pred_check_branch
      %19 = sbr.rel (0) target = $region13
    $region12: #{tpu_custom_call.1} parent=1 // pred_region
      _
    $region13: #{tpu_custom_call.1} parent=1 // pred_fallthru
      _
    // Predicated region
    $region14: #{tpu_custom_call.1} parent=1 // pred_check
      _
    $region15: #{tpu_custom_call.1} parent=1 // pred_check_branch
      %21 = sbr.rel (0) target = $region17
    $region16: #{tpu_custom_call.1} parent=1 // pred_region
      _
    $region17: #{tpu_custom_call.1} parent=1 // pred_fallthru
      _
    // Predicated region
    $region18: #{tpu_custom_call.1} parent=1 // pred_check
      _
    $region19: #{tpu_custom_call.1} parent=1 // pred_check_branch
      %23 = sbr.rel (0) target = $region21
    $region20: #{tpu_custom_call.1} parent=1 // pred_region
      %25 = vsyncadd [#allocation3], 0
      %s26 = sshll.u32 %s4, 4
      %s27 = int_to_ptr.hbm [resolvable:$true] %s26
      %s28 = sshll.u32 [#allocation2], 4
      %s29 = int_to_ptr.vmem [resolvable:$true] %s28
      %34 = dma.hbm_to_vmem [thread:$0]  %s27, 2048, %s29, [#allocation3], 128, 128, 8
    $region21: #{tpu_custom_call.1} parent=1 // pred_fallthru
      _
    // Predicated region
    $region22: #{tpu_custom_call.1} parent=1 // pred_check
      _
    $region23: #{tpu_custom_call.1} parent=1 // pred_check_branch
      %36 = sbr.rel (0) target = $region25
    $region24: #{tpu_custom_call.1} parent=1 // pred_region
      _
    $region25: #{tpu_custom_call.1} parent=1 // pred_fallthru
      _
    // Predicated region
    $region26: #{tpu_custom_call.1} parent=1 // pred_check
      _
    $region27: #{tpu_custom_call.1} parent=1 // pred_check_branch
      %38 = sbr.rel (0) target = $region29
    $region28: #{tpu_custom_call.1} parent=1 // pred_region
      _
    $region29: #{tpu_custom_call.1} parent=1 // pred_fallthru
      _
    // Predicated region
    $region30: #{tpu_custom_call.1} parent=1 // pred_check
      _
    $region31: #{tpu_custom_call.1} parent=1 // pred_check_branch
      %40 = sbr.rel (0) target = $region33
    $region32: #{tpu_custom_call.1} parent=1 // pred_region
      _
    $region33: #{tpu_custom_call.1} parent=1 // pred_fallthru
      _
    // Predicated region
    $region34: #{tpu_custom_call.1} parent=1 // pred_check
      _
    $region35: #{tpu_custom_call.1} parent=1 // pred_check_branch
      %42 = sbr.rel (0) target = $region37
    $region36: #{tpu_custom_call.1} parent=1 // pred_region
      %44 = dma.done [#allocation3], 2048
    $region37: #{tpu_custom_call.1} parent=1 // pred_fallthru
      _
    %v45 = vld [vmem:[%s0] sm:$0xff]
    %v46 = vld [vmem:[%s1] sm:$0xf]
    %v47 = vld [vmem:[%s2] sm:$0x1]
    %v49 = vperm.slane %v47, 0
    %vm51 = vcmask 31744
    %v53 = vsel %vm51, %v45, 0
    %vm55 = vcmask 1043456
    %v57 = vsel %vm55, %v46, 0
    %59 = vmatpush.msra.mxu0 0.0
    %60 = vmatpush.msra.mxu0 0.0
    %61 = vmatpush.msra.mxu0 0.0
    %62 = vmatpush.msra.mxu0 0.0
    %63 = vmatpush.msra.mxu0 0.0
    %64 = vmatpush.msra.mxu0 0.0
    %65 = vmatpush.msra.mxu0 0.0
    %66 = vmatpush.msra.mxu0 0.0
    %67 = vmatpush.msra.mxu0 0.0
    %68 = vmatpush.msra.mxu0 0.0
    %69 = vmatpush.msra.mxu0 0.0
    %70 = vmatpush.msra.mxu0 0.0
    %71 = vmatpush.msra.mxu0 0.0
    %72 = vmatpush.msra.mxu0 0.0
    %73 = vmatpush.msra.mxu0 0.0
    %74 = vmatpush.msra.mxu0 %v57
    %75 = vmatmul.f32.gmra.mxu0 %v53
    %v76 = vpop.f32.mrf.mxu0
    %v77 = vadd.f32 %v49, %v76
    %78 = vdwg.mxu0
    %v79 = vtanh.pop %v77
    %v80 = vld [vmem:[%s3] sm:$0xff]
    %v81 = vld [vmem:[%s3 + $0x8] sm:$0xff]
    %v82 = vld [vmem:[%s3 + $0x10] sm:$0xff]
    %v83 = vld [vmem:[%s3 + $0x18] sm:$0xff]
    %v84 = vld [vmem:[%s3 + $0x20] sm:$0xff]
    %v85 = vld [vmem:[%s3 + $0x28] sm:$0xff]
    %v86 = vld [vmem:[%s3 + $0x30] sm:$0xff]
    %v87 = vld [vmem:[%s3 + $0x38] sm:$0xff]
    %v88 = vld [vmem:[%s3 + $0x40] sm:$0xff]
    %v89 = vld [vmem:[%s3 + $0x48] sm:$0xff]
    %v90 = vld [vmem:[%s3 + $0x50] sm:$0xff]
    %v91 = vld [vmem:[%s3 + $0x58] sm:$0xff]
    %v92 = vld [vmem:[%s3 + $0x60] sm:$0xff]
    %v93 = vld [vmem:[%s3 + $0x68] sm:$0xff]
    %v94 = vld [vmem:[%s3 + $0x70] sm:$0xff]
    %v95 = vld [vmem:[%s3 + $0x78] sm:$0xff]
    %v96 = vld [vmem:[%s5] sm:$0x1]
    %v98 = vperm.slane %v96, 0
    %100 = vmatpush.msra.mxu0 %v95
    %101 = vmatpush.msra.mxu0 %v94
    %102 = vmatpush.msra.mxu0 %v93
    %103 = vmatpush.msra.mxu0 %v92
    %104 = vmatpush.msra.mxu0 %v91
    %105 = vmatpush.msra.mxu0 %v90
    %106 = vmatpush.msra.mxu0 %v89
    %107 = vmatpush.msra.mxu0 %v88
    %108 = vmatpush.msra.mxu0 %v87
    %109 = vmatpush.msra.mxu0 %v86
    %110 = vmatpush.msra.mxu0 %v85
    %111 = vmatpush.msra.mxu0 %v84
    %112 = vmatpush.msra.mxu0 %v83
    %113 = vmatpush.msra.mxu0 %v82
    %114 = vmatpush.msra.mxu0 %v81
    %115 = vmatpush.msra.mxu0 %v80
    %116 = vmatmul.f32.gmra.mxu0 %v79
    %v117 = vpop.f32.mrf.mxu0
    %v118 = vadd.f32 %v98, %v117
    %119 = vdwg.mxu0
    %v120 = vtanh.pop %v118
    %v121 = vld [vmem:[%s6] sm:$0x1]
    %v122 = vmul.f32 %v120, %v120
    %v123 = vsub.f32 1.0, %v122
    %v125 = vperm.slane %v121, 0
    %v127 = vmul.f32 %v125, %v123
    %v128 = vld [vmem:[#allocation2] sm:$0xff]
    %v129 = vld [vmem:[#allocation2 + $0x8] sm:$0xff]
    %v130 = vld [vmem:[#allocation2 + $0x10] sm:$0xff]
    %v131 = vld [vmem:[#allocation2 + $0x18] sm:$0xff]
    %v132 = vld [vmem:[#allocation2 + $0x20] sm:$0xff]
    %v133 = vld [vmem:[#allocation2 + $0x28] sm:$0xff]
    %v134 = vld [vmem:[#allocation2 + $0x30] sm:$0xff]
    %v135 = vld [vmem:[#allocation2 + $0x38] sm:$0xff]
    %v136 = vld [vmem:[#allocation2 + $0x40] sm:$0xff]
    %v137 = vld [vmem:[#allocation2 + $0x48] sm:$0xff]
    %v138 = vld [vmem:[#allocation2 + $0x50] sm:$0xff]
    %v139 = vld [vmem:[#allocation2 + $0x58] sm:$0xff]
    %v140 = vld [vmem:[#allocation2 + $0x60] sm:$0xff]
    %v141 = vld [vmem:[#allocation2 + $0x68] sm:$0xff]
    %v142 = vld [vmem:[#allocation2 + $0x70] sm:$0xff]
    %v143 = vld [vmem:[#allocation2 + $0x78] sm:$0xff]
    %144 = vmatpush.msra.mxu0 %v143
    %145 = vmatpush.msra.mxu0 %v142
    %146 = vmatpush.msra.mxu0 %v141
    %147 = vmatpush.msra.mxu0 %v140
    %148 = vmatpush.msra.mxu0 %v139
    %149 = vmatpush.msra.mxu0 %v138
    %150 = vmatpush.msra.mxu0 %v137
    %151 = vmatpush.msra.mxu0 %v136
    %152 = vmatpush.msra.mxu0 %v135
    %153 = vmatpush.msra.mxu0 %v134
    %154 = vmatpush.msra.mxu0 %v133
    %155 = vmatpush.msra.mxu0 %v132
    %156 = vmatpush.msra.mxu0 %v131
    %157 = vmatpush.msra.mxu0 %v130
    %158 = vmatpush.msra.mxu0 %v129
    %159 = vmatpush.msra.mxu0 %v128
    %160 = vmatmul.f32.gmra.mxu0 %v127
    %v161 = vpop.f32.mrf.mxu0
    %v162 = vadd.f32 0.0, %v161
    %163 = vdwg.mxu0
    %v164 = vadd.f32 %v125, %v162
    %v165 = vmul.f32 %v79, %v79
    %v166 = vsub.f32 1.0, %v165
    %v167 = vmul.f32 %v164, %v166
    %v168 = vld [vmem:[%s7] sm:$0xff]
    %v169 = vld [vmem:[%s7 + $0x8] sm:$0xff]
    %v170 = vld [vmem:[%s7 + $0x10] sm:$0xff]
    %v171 = vld [vmem:[%s7 + $0x18] sm:$0xff]
    %v172 = vld [vmem:[%s7 + $0x20] sm:$0xff]
    %v173 = vld [vmem:[%s7 + $0x28] sm:$0xff]
    %v174 = vld [vmem:[%s7 + $0x30] sm:$0xff]
    %v175 = vld [vmem:[%s7 + $0x38] sm:$0xff]
    %v176 = vld [vmem:[%s7 + $0x40] sm:$0xff]
    %v177 = vld [vmem:[%s7 + $0x48] sm:$0xff]
    %v178 = vld [vmem:[%s7 + $0x50] sm:$0xff]
    %v179 = vld [vmem:[%s7 + $0x58] sm:$0xff]
    %v180 = vld [vmem:[%s7 + $0x60] sm:$0xff]
    %v181 = vld [vmem:[%s7 + $0x68] sm:$0xff]
    %v182 = vld [vmem:[%s7 + $0x70] sm:$0xff]
    %v183 = vld [vmem:[%s7 + $0x78] sm:$0xff]
    %184 = vmatpush.msra.mxu0 %v183
    %185 = vmatpush.msra.mxu0 %v182
    %186 = vmatpush.msra.mxu0 %v181
    %187 = vmatpush.msra.mxu0 %v180
    %188 = vmatpush.msra.mxu0 %v179
    %189 = vmatpush.msra.mxu0 %v178
    %190 = vmatpush.msra.mxu0 %v177
    %191 = vmatpush.msra.mxu0 %v176
    %192 = vmatpush.msra.mxu0 %v175
    %193 = vmatpush.msra.mxu0 %v174
    %194 = vmatpush.msra.mxu0 %v173
    %195 = vmatpush.msra.mxu0 %v172
    %196 = vmatpush.msra.mxu0 %v171
    %197 = vmatpush.msra.mxu0 %v170
    %198 = vmatpush.msra.mxu0 %v169
    %199 = vmatpush.msra.mxu0 %v168
    %200 = vmatmul.f32.gmra.mxu0 %v167
    %v201 = vpop.f32.mrf.mxu0
    %v202 = vadd.f32 0.0, %v201
    %203 = vdwg.mxu0
    %204 = vst.msk [vmem:[%s8] sm:$0xff] %vm51, %v202
    // Predicated region
    $region38: #{tpu_custom_call.1} parent=1 // pred_check
      _
    $region39: #{tpu_custom_call.1} parent=1 // pred_check_branch
      %206 = sbr.rel (0) target = $region41
    $region40: #{tpu_custom_call.1} parent=1 // pred_region
      _
    $region41: #{tpu_custom_call.1} parent=1 // pred_fallthru
      _
    // Predicated region
    $region42: #{tpu_custom_call.1} parent=1 // pred_check
      _
    $region43: #{tpu_custom_call.1} parent=1 // pred_check_branch
      %208 = sbr.rel (0) target = $region45
    $region44: #{tpu_custom_call.1} parent=1 // pred_region
      _
    $region45: #{tpu_custom_call.1} parent=1 // pred_fallthru
      _
    %209 = vsyncpa [#allocation3], 1

</llo_original>
